<compile_context>
chip_gen: v7x
topology: tpu7x:2x2x1
jax: 0.10.0
libtpu: 0.0.40
codegen_flags: <defaults>
</compile_context>

<pallas_src>
import jax
import jax.numpy as jnp
from jax.experimental import pallas as pl
from jax.experimental.pallas import tpu as pltpu

_LANES = 128


def _dice_kernel(x_ref, t_ref, out_ref, acc_ref):
    j = pl.program_id(1)

    @pl.when(j == 0)
    def _():
        acc_ref[...] = jnp.zeros_like(acc_ref)

    # Hot loop: pure per-lane VPU accumulate (no cross-lane reduce here).
    acc_ref[...] += x_ref[...].astype(jnp.float32) + t_ref[...].astype(jnp.float32)

    @pl.when(j == pl.num_programs(1) - 1)
    def _():
        tile_r = acc_ref.shape[0]
        # Fold (tile_r, 128) partials into one vreg-shaped (8, 128) block:
        # the reshape matches the (8, 128) vreg layout, so this is plain VPU
        # adds followed by a single unmasked 8x128 store.
        out_ref[...] = jnp.sum(
            acc_ref[...].reshape(tile_r // 8, 8, _LANES), axis=0
        )


def binary_dice_loss(inputs, targets, *, max_tile_rows=2048):
    assert inputs.shape == targets.shape
    N = targets.shape[0]
    x = inputs.reshape(N, -1)
    t = targets.reshape(N, -1)
    D = x.shape[1]

    rows = pl.cdiv(D, _LANES)
    # tile_r: multiple of 8, capped so each input block is ~<= 1 MiB (f32).
    tile_r = min(int(max_tile_rows), pl.cdiv(rows, 8) * 8)
    rows_pad = pl.cdiv(rows, tile_r) * tile_r
    D_pad = rows_pad * _LANES
    if D_pad != D:
        # Zero padding is sum-safe; only taken when D doesn't divide the tile.
        x = jnp.pad(x, ((0, 0), (0, D_pad - D)))
        t = jnp.pad(t, ((0, 0), (0, D_pad - D)))
    # Lane-dense layout: (N, rows_pad, 128). Row-major reshape => no copy.
    x = x.reshape(N, rows_pad, _LANES)
    t = t.reshape(N, rows_pad, _LANES)

    n_tiles = rows_pad // tile_r

    per_sample_partials = pl.pallas_call(
        _dice_kernel,
        out_shape=jax.ShapeDtypeStruct((N, 8, _LANES), jnp.float32),
        grid_spec=pltpu.PrefetchScalarGridSpec(
            num_scalar_prefetch=0,
            grid=(N, n_tiles),
            in_specs=[
                pl.BlockSpec((None, tile_r, _LANES), lambda i, j: (i, j, 0)),
                pl.BlockSpec((None, tile_r, _LANES), lambda i, j: (i, j, 0)),
            ],
            out_specs=pl.BlockSpec((None, 8, _LANES), lambda i, j: (i, 0, 0)),
            scratch_shapes=[pltpu.VMEM((tile_r, _LANES), jnp.float32)],
        ),
        compiler_params=pltpu.CompilerParams(
            # N axis parallel (v7x 2 TCs), feature/reduction axis arbitrary.
            dimension_semantics=("parallel", "arbitrary"),
            vmem_limit_bytes=32 * 1024 * 1024,
        ),
    )(x, t)

    # Tiny epilogue in plain JAX: s = sum(x) + sum(t) per sample.
    s = jnp.sum(per_sample_partials.reshape(N, -1), axis=-1)
    smooth = jnp.float32(1.0)
    dice = (2.0 * s + smooth) / (s + smooth)
    return jnp.float32(1.0) - jnp.sum(dice) / jnp.float32(N)


def _reference(inputs, targets):
    # Faithful re-implementation of the (buggy) PyTorch module in pure JAX.
    N = targets.shape[0]
    smooth = 1.0
    xf = inputs.reshape(N, -1)
    tf = targets.reshape(N, -1)
    inter = xf + tf  # matches the PyTorch source (sum, not product)
    dice = (2.0 * inter.sum(1) + smooth) / (xf.sum(1) + tf.sum(1) + smooth)
    return 1.0 - dice.sum() / N


if __name__ == "__main__":
    key = jax.random.PRNGKey(0)
    k1, k2 = jax.random.split(key)
    # NCHW inputs: sigmoid-like predictions and binary targets.
    x = jax.nn.sigmoid(jax.random.normal(k1, (2, 4, 16, 16), dtype=jnp.float32))
    y = (jax.random.uniform(k2, (2, 4, 16, 16)) > 0.5).astype(jnp.float32)

    loss = jax.block_until_ready(binary_dice_loss(x, y))
    ref = _reference(jnp.asarray(x), jnp.asarray(y))

    assert jnp.allclose(loss, ref, rtol=1e-5, atol=1e-5), (loss, ref)
    print("KERNEL_OK")
</pallas_src>

<mosaic_0001>
module attributes {stable_mosaic.version = 11 : i64} {
  func.func @_dice_kernel(%arg0: i32, %arg1: i32, %arg2: memref<1x8x128xf32, #tpu.memory_space<vmem>>, %arg3: memref<1x8x128xf32, #tpu.memory_space<vmem>>, %arg4: memref<1x8x128xf32, #tpu.memory_space<vmem>>, %arg5: memref<8x128xf32, #tpu.memory_space<vmem>>) attributes {dimension_semantics = [#tpu.dimension_semantics<parallel>, #tpu.dimension_semantics<arbitrary>], iteration_bounds = array<i64: 2, 1>, scalar_prefetch = 0 : i64, scratch_operands = 1 : i64, tpu.core_type = #tpu.core_type<tc>, window_params = [{transform_indices = @transform_0, window_bounds = array<i64: 1, 8, 128>}, {transform_indices = @transform_1, window_bounds = array<i64: 1, 8, 128>}, {transform_indices = @transform_2, window_bounds = array<i64: 1, 8, 128>}]} {
    %c0_i32 = arith.constant 0 : i32
    %0 = arith.cmpi eq, %arg1, %c0_i32 : i32
    %1 = arith.extui %0 : i1 to i32
    %c0_i32_0 = arith.constant 0 : i32
    %2 = arith.cmpi ne, %1, %c0_i32_0 : i32
    scf.if %2 {
      %cst = arith.constant 0.000000e+00 : f32
      %14 = vector.broadcast %cst : f32 to vector<8x128xf32>
      %c0_12 = arith.constant 0 : index
      %c0_13 = arith.constant 0 : index
      %15 = vector.load %arg5[%c0_12, %c0_13] : memref<8x128xf32, #tpu.memory_space<vmem>>, vector<8x128xf32>
      tpu.vector_store %arg5[%c0_12, %c0_13], %14 {strides = array<i32>} : memref<8x128xf32, #tpu.memory_space<vmem>>, vector<8x128xf32>,
    } else {
    }
    %c0 = arith.constant 0 : index
    %c0_1 = arith.constant 0 : index
    %3 = vector.load %arg5[%c0, %c0_1] : memref<8x128xf32, #tpu.memory_space<vmem>>, vector<8x128xf32>
    %c0_2 = arith.constant 0 : index
    %c0_3 = arith.constant 0 : index
    %c0_4 = arith.constant 0 : index
    %4 = vector.load %arg2[%c0_2, %c0_3, %c0_4] : memref<1x8x128xf32, #tpu.memory_space<vmem>>, vector<1x8x128xf32>
    %5 = vector.shape_cast %4 : vector<1x8x128xf32> to vector<8x128xf32>
    %c0_5 = arith.constant 0 : index
    %c0_6 = arith.constant 0 : index
    %c0_7 = arith.constant 0 : index
    %6 = vector.load %arg3[%c0_5, %c0_6, %c0_7] : memref<1x8x128xf32, #tpu.memory_space<vmem>>, vector<1x8x128xf32>
    %7 = vector.shape_cast %6 : vector<1x8x128xf32> to vector<8x128xf32>
    %8 = arith.addf %5, %7 : vector<8x128xf32>
    %9 = arith.addf %3, %8 : vector<8x128xf32>
    %c0_8 = arith.constant 0 : index
    %c0_9 = arith.constant 0 : index
    %10 = vector.load %arg5[%c0_8, %c0_9] : memref<8x128xf32, #tpu.memory_space<vmem>>, vector<8x128xf32>
    tpu.vector_store %arg5[%c0_8, %c0_9], %9 {strides = array<i32>} : memref<8x128xf32, #tpu.memory_space<vmem>>, vector<8x128xf32>,
    %c0_i32_10 = arith.constant 0 : i32
    %11 = arith.cmpi eq, %arg1, %c0_i32_10 : i32
    %12 = arith.extui %11 : i1 to i32
    %c0_i32_11 = arith.constant 0 : i32
    %13 = arith.cmpi ne, %12, %c0_i32_11 : i32
    scf.if %13 {
      %c0_12 = arith.constant 0 : index
      %c0_13 = arith.constant 0 : index
      %14 = vector.load %arg5[%c0_12, %c0_13] : memref<8x128xf32, #tpu.memory_space<vmem>>, vector<8x128xf32>
      %15 = vector.shape_cast %14 : vector<8x128xf32> to vector<1x8x128xf32>
      %cst = arith.constant dense<0.000000e+00> : vector<8x128xf32>
      %16 = vector.multi_reduction <add>, %15, %cst [0] : vector<1x8x128xf32> to vector<8x128xf32>
      %c0_14 = arith.constant 0 : index
      %c0_15 = arith.constant 0 : index
      %c0_16 = arith.constant 0 : index
      %17 = vector.load %arg4[%c0_14, %c0_15, %c0_16] : memref<1x8x128xf32, #tpu.memory_space<vmem>>, vector<1x8x128xf32>
      %18 = vector.shape_cast %17 : vector<1x8x128xf32> to vector<8x128xf32>
      %19 = vector.shape_cast %16 : vector<8x128xf32> to vector<1x8x128xf32>
      tpu.vector_store %arg4[%c0_14, %c0_15, %c0_16], %19 {strides = array<i32>} : memref<1x8x128xf32, #tpu.memory_space<vmem>>, vector<1x8x128xf32>,
    } else {
    }
    return
  }
  func.func @transform_0(%arg0: i32, %arg1: i32) -> (i32, i32, i32) {
    %c0_i32 = arith.constant 0 : i32
    %c0_i32_0 = arith.constant 0 : i32
    return %arg0, %arg1, %c0_i32 : i32, i32, i32
  }
  func.func @transform_1(%arg0: i32, %arg1: i32) -> (i32, i32, i32) {
    %c0_i32 = arith.constant 0 : i32
    %c0_i32_0 = arith.constant 0 : i32
    return %arg0, %arg1, %c0_i32 : i32, i32, i32
  }
  func.func @transform_2(%arg0: i32, %arg1: i32) -> (i32, i32, i32) {
    %c0_i32 = arith.constant 0 : i32
    %c0_i32_0 = arith.constant 0 : i32
    %c0_i32_1 = arith.constant 0 : i32
    return %arg0, %c0_i32, %c0_i32_0 : i32, i32, i32
  }
}

</mosaic_0001>

<llo_original>
// kernel: tpu_custom_call.1
$region0: #{tpu_custom_call.1}
  #allocation0 [shape = 'u32[]', space=smem, size = 0x4, offset = 0x4, fixed_abs, tag = 'smem constant byte address 0x4 - core index']
  #allocation1 [shape = 'u32[144,128]{1,0:T(1,128)}', space=vmem, size = 0x12000, scoped, tag = 'internal scratch']
  #allocation2 [shape = 'f32[8,128]{1,0:T(8,128)}', space=vmem, size = 0x1000, scoped, tag = 'scratch operand']
  %s0 = inlined_call_operand.hbm [shape: f32[2,8,128], index: 0, kind: input, shape index: {}]
  %s1 = inlined_call_operand.hbm [shape: f32[2,8,128], index: 1, kind: input, shape index: {}]
  %s2 = inlined_call_operand.hbm [shape: f32[2,8,128], index: 2, kind: output, shape index: {}]
  %s3 = sld [smem:[#allocation0]]
  $region57: #{tpu_custom_call.1} parent=0
    _
  %s5 = ssub.s32 1, %s3
  %s6 = scalar_select 0, %s5, %s3
  $region1: #{tpu_custom_call.1} parent=0
    #allocation3 [shape = 'u8[8192]{0}', space=vmem, size = 0x2000, scoped, tag = 'input window, operand 0']
    #allocation4 [shape = 's32[2]{0}', space=sflag, size = 0x8, scoped, tag = 'scoped memory for tpu_custom_call.1']
    #allocation5 [shape = 's32[2]{0}', space=sflag, size = 0x8, scoped, tag = 'scoped memory for tpu_custom_call.1']
    #allocation6 [shape = 'u8[8192]{0}', space=vmem, size = 0x2000, scoped, tag = 'input window, operand 1']
    #allocation7 [shape = 's32[2]{0}', space=sflag, size = 0x8, scoped, tag = 'scoped memory for tpu_custom_call.1']
    #allocation8 [shape = 'u8[8192]{0}', space=vmem, size = 0x2000, scoped, tag = 'output window, operand 0']
    %7 = vsyncpa [#allocation4], 0
    %s8 = scalar_lea.sflag [#allocation4], 1
    %9 = vsyncpa %s8, 0
    %10 = vsyncpa [#allocation7], 0
    %s11 = scalar_lea.sflag [#allocation7], 1
    %12 = vsyncpa %s11, 0
    %13 = vsyncpa [#allocation5], 0
    %s14 = scalar_lea.sflag [#allocation5], 1
    %15 = vsyncpa %s14, 0
    loop: start=0, step=1, limit=4
    $region2: #{tpu_custom_call.1} parent=1 // loop_pre_header
      _
    $region3: #{tpu_custom_call.1} parent=1 // loop_header
      %s17 = sphi 0, %s21
      %p18 = scmp.ge.s32.totalorder %s17, 4
      %s24 = sphi 0, %s36
      %s25 = sphi 0, %s32
      %s26 = sphi 0, %s24
      %s27 = sphi 0, %s25
      %s28 = sphi 0, %s26
      %s29 = sphi 0, %s27
      %s41 = sphi 0, %s43
      %s44 = sphi 0, %s41
      %s45 = sphi 0, %s44
      %s61 = sphi 0, %s45
      %s69 = sphi 0, %s71
      %s72 = sphi 0, %s69
      %s73 = sphi 0, %s72
      %s89 = sphi 0, %s73
      %s95 = sphi 0, %s97
      %s98 = sphi 0, %s95
      %s99 = sphi 0, %s98
      %s115 = sphi 0, %s99
    $region4: #{tpu_custom_call.1} parent=1 // loop_header_branch
      %20 = sbr.rel (%p18) target = $region8
    $region5: #{tpu_custom_call.1} parent=1 // loop_body
      %s22 = ssub.s32 %s17, 1
      %s23 = ssub.s32 %s17, 2
      %s30 = sadd.s32 1, %s25
      %p31 = scmp.ge.s32.totalorder %s30, 1
      %s32 = scalar_select %p31, 0, %s30
      %s33 = sadd.s32 1, %s24
      %s34 = scalar_select %p31, %s33, %s24
      %p35 = scmp.ge.s32.totalorder %s34, 2
      %s36 = scalar_select %p35, 0, %s34
      %s37 = ssub.s32 %s24, %s36
      %s38 = ssub.s32 %s25, %s32
      %s39 = sor.u32 %s37, %s38
      %p40 = scmp.eq.s32.totalorder %s39, 0
      %s42 = sadd.s32 %s41, 1
      %s43 = scalar_select %p40, %s41, %s42
      %p46 = pneg %p40
      %p47 = scmp.eq.s32.totalorder %s17, 1
      %p48 = por %p46, %p47
      %p49 = scmp.ne.s32.totalorder %s41, %s44
      %p50 = scmp.eq.s32.totalorder %s17, 0
      %p51 = por %p49, %p50
      %p52 = scmp.ne.s32.totalorder %s41, %s44
      %p53 = scmp.eq.s32.totalorder %s22, 1
      %p54 = por %p52, %p53
      %p55 = scmp.ne.s32.totalorder %s44, %s45
      %p56 = scmp.eq.s32.totalorder %s22, 0
      %p57 = por %p55, %p56
      %p58 = scmp.ne.s32.totalorder %s44, %s45
      %p59 = scmp.eq.s32.totalorder %s23, 1
      %p60 = por %p58, %p59
      %p62 = scmp.ne.s32.totalorder %s45, %s61
      %p63 = scmp.eq.s32.totalorder %s23, 0
      %p64 = por %p62, %p63
      %s65 = ssub.s32 %s24, %s36
      %s66 = ssub.s32 %s25, %s32
      %s67 = sor.u32 %s65, %s66
      %p68 = scmp.eq.s32.totalorder %s67, 0
      %s70 = sadd.s32 %s69, 1
      %s71 = scalar_select %p68, %s69, %s70
      %p74 = pneg %p68
      %p75 = scmp.eq.s32.totalorder %s17, 1
      %p76 = por %p74, %p75
      %p77 = scmp.ne.s32.totalorder %s69, %s72
      %p78 = scmp.eq.s32.totalorder %s17, 0
      %p79 = por %p77, %p78
      %p80 = scmp.ne.s32.totalorder %s69, %s72
      %p81 = scmp.eq.s32.totalorder %s22, 1
      %p82 = por %p80, %p81
      %p83 = scmp.ne.s32.totalorder %s72, %s73
      %p84 = scmp.eq.s32.totalorder %s22, 0
      %p85 = por %p83, %p84
      %p86 = scmp.ne.s32.totalorder %s72, %s73
      %p87 = scmp.eq.s32.totalorder %s23, 1
      %p88 = por %p86, %p87
      %p90 = scmp.ne.s32.totalorder %s73, %s89
      %p91 = scmp.eq.s32.totalorder %s23, 0
      %p92 = por %p90, %p91
      %s93 = ssub.s32 %s24, %s36
      %p94 = scmp.eq.s32.totalorder %s93, 0
      %s96 = sadd.s32 %s95, 1
      %s97 = scalar_select %p94, %s95, %s96
      %p100 = pneg %p94
      %p101 = scmp.eq.s32.totalorder %s17, 1
      %p102 = por %p100, %p101
      %p103 = scmp.ne.s32.totalorder %s95, %s98
      %p104 = scmp.eq.s32.totalorder %s17, 0
      %p105 = por %p103, %p104
      %p106 = scmp.ne.s32.totalorder %s95, %s98
      %p107 = scmp.eq.s32.totalorder %s22, 1
      %p108 = por %p106, %p107
      %p109 = scmp.ne.s32.totalorder %s98, %s99
      %p110 = scmp.eq.s32.totalorder %s22, 0
      %p111 = por %p109, %p110
      %p112 = scmp.ne.s32.totalorder %s98, %s99
      %p113 = scmp.eq.s32.totalorder %s23, 1
      %p114 = por %p112, %p113
      %p116 = scmp.ne.s32.totalorder %s99, %s115
      %p117 = scmp.eq.s32.totalorder %s23, 0
      %p118 = por %p116, %p117
      %p119 = scmp.le.s32.totalorder 1, %s17
      %p120 = scmp.lt.s32.totalorder %s17, 3
      %p121 = pnand %p119, %p120
      %p122 = pneg %p121
      // Predicated region
      $region9: #{tpu_custom_call.1} parent=5 // pred_check
        _
      $region10: #{tpu_custom_call.1} parent=5 // pred_check_branch
        %124 = sbr.rel (%p121) target = $region12
      $region11: #{tpu_custom_call.1} parent=5 // pred_region
        %s125 = ssub.s32 %s17, 1
      $region12: #{tpu_custom_call.1} parent=5 // pred_fallthru
        _
      %p126 = scmp.lt.s32.totalorder %s17, 2
      // Predicated region
      $region13: #{tpu_custom_call.1} parent=5 // pred_check
        %p127 = pneg %p126
      $region14: #{tpu_custom_call.1} parent=5 // pred_check_branch
        %129 = sbr.rel (%p127) target = $region16
      $region15: #{tpu_custom_call.1} parent=5 // pred_region
        // Predicated region
        $region17: #{tpu_custom_call.1} parent=15 // pred_check
          %p130 = pneg %p51
        $region18: #{tpu_custom_call.1} parent=15 // pred_check_branch
          %132 = sbr.rel (%p130) target = $region20
        $region19: #{tpu_custom_call.1} parent=15 // pred_region
          %s133 = sand.u32 %s41, 1
          %s134 = scalar_lea.sflag [#allocation4], %s133
          %s135 = sand.u32 %s41, 1
          %s136 = smul.addr %s135, 8
          %s137 = scalar_lea.vmem [#allocation3], %s136
          %s139 = ssub.s32 128, 128
          %140 = vsyncadd %s134, %s139
          %s141 = sadd.s32 %s25, %s24
          %s142 = smul.addr %s141, 128
          %s143 = scalar_lea.hbm %s0, %s142
          %s145 = sshll.u32 %s137, 4
          %s146 = int_to_ptr.vmem [resolvable:$true] %s145
          %148 = dma.hbm_to_vmem [thread:$0]  %s143, 128, %s146, %s134
        $region20: #{tpu_custom_call.1} parent=15 // pred_fallthru
          _
        // Predicated region
        $region21: #{tpu_custom_call.1} parent=15 // pred_check
          %p149 = pneg %p79
        $region22: #{tpu_custom_call.1} parent=15 // pred_check_branch
          %151 = sbr.rel (%p149) target = $region24
        $region23: #{tpu_custom_call.1} parent=15 // pred_region
          %s152 = sand.u32 %s69, 1
          %s153 = scalar_lea.sflag [#allocation7], %s152
          %s154 = sand.u32 %s69, 1
          %s155 = smul.addr %s154, 8
          %s156 = scalar_lea.vmem [#allocation6], %s155
          %s158 = ssub.s32 128, 128
          %159 = vsyncadd %s153, %s158
          %s160 = sadd.s32 %s25, %s24
          %s161 = smul.addr %s160, 128
          %s162 = scalar_lea.hbm %s1, %s161
          %s164 = sshll.u32 %s156, 4
          %s165 = int_to_ptr.vmem [resolvable:$true] %s164
          %167 = dma.hbm_to_vmem [thread:$0]  %s162, 128, %s165, %s153
        $region24: #{tpu_custom_call.1} parent=15 // pred_fallthru
          _
      $region16: #{tpu_custom_call.1} parent=5 // pred_fallthru
        _
      %p168 = scmp.le.s32.totalorder 1, %s17
      %p169 = scmp.lt.s32.totalorder %s17, 3
      %p170 = pnand %p168, %p169
      %p171 = pneg %p170
      // Predicated region
      $region25: #{tpu_custom_call.1} parent=5 // pred_check
        _
      $region26: #{tpu_custom_call.1} parent=5 // pred_check_branch
        %173 = sbr.rel (%p170) target = $region28
      $region27: #{tpu_custom_call.1} parent=5 // pred_region
        %s174 = ssub.s32 %s17, 1
        %s175 = sand.u32 %s44, 1
        %s176 = scalar_lea.sflag [#allocation4], %s175
        %s177 = sand.u32 %s44, 1
        %s178 = smul.addr %s177, 8
        %s179 = scalar_lea.vmem [#allocation3], %s178
        // Predicated region
        $region29: #{tpu_custom_call.1} parent=27 // pred_check
          %p180 = pneg %p57
        $region30: #{tpu_custom_call.1} parent=27 // pred_check_branch
          %182 = sbr.rel (%p180) target = $region32
        $region31: #{tpu_custom_call.1} parent=27 // pred_region
          %183 = dma.done %s176, 128
        $region32: #{tpu_custom_call.1} parent=27 // pred_fallthru
          _
        %s184 = sand.u32 %s72, 1
        %s185 = scalar_lea.sflag [#allocation7], %s184
        %s186 = sand.u32 %s72, 1
        %s187 = smul.addr %s186, 8
        %s188 = scalar_lea.vmem [#allocation6], %s187
        // Predicated region
        $region33: #{tpu_custom_call.1} parent=27 // pred_check
          %p189 = pneg %p85
        $region34: #{tpu_custom_call.1} parent=27 // pred_check_branch
          %191 = sbr.rel (%p189) target = $region36
        $region35: #{tpu_custom_call.1} parent=27 // pred_region
          %192 = dma.done %s185, 128
        $region36: #{tpu_custom_call.1} parent=27 // pred_fallthru
          _
        %s193 = sand.u32 %s44, 1
        %s194 = scalar_lea.sflag [#allocation4], %s193
        %s195 = sand.u32 %s44, 1
        %s196 = smul.addr %s195, 8
        %s197 = scalar_lea.vmem [#allocation3], %s196
        %p198 = pneg %p57
        %p199 = pneg %p54
        %s200 = sand.u32 %s72, 1
        %s201 = scalar_lea.sflag [#allocation7], %s200
        %s202 = sand.u32 %s72, 1
        %s203 = smul.addr %s202, 8
        %s204 = scalar_lea.vmem [#allocation6], %s203
        %p205 = pneg %p85
        %p206 = pneg %p82
        %p207 = pneg %p111
        %p208 = pneg %p108
        %s209 = sand.u32 %s98, 1
        %s210 = scalar_lea.sflag [#allocation5], %s209
        %s211 = sand.u32 %s98, 1
        %s212 = smul.addr %s211, 8
        %s213 = scalar_lea.vmem [#allocation8], %s212
        %p214 = scmp.eq.s32.totalorder %s27, 0
        // Predicated region
        $region37: #{tpu_custom_call.1} parent=27 // pred_check
          %p215 = pneg %p214
        $region38: #{tpu_custom_call.1} parent=27 // pred_check_branch
          %217 = sbr.rel (%p215) target = $region40
        $region39: #{tpu_custom_call.1} parent=27 // pred_region
          %218 = vst [vmem:[#allocation2] sm:$0xff] 0.0
        $region40: #{tpu_custom_call.1} parent=27 // pred_fallthru
          _
        %v219 = vld [vmem:[#allocation2] sm:$0xff]
        %v220 = vld [vmem:[%s179] sm:$0xff]
        %v221 = vld [vmem:[%s188] sm:$0xff]
        %v222 = vadd.f32 %v220, %v221
        %v223 = vadd.f32 %v219, %v222
        %224 = vst [vmem:[#allocation2] sm:$0xff] %v223
        // Predicated region
        $region41: #{tpu_custom_call.1} parent=27 // pred_check
          %p225 = pneg %p214
        $region42: #{tpu_custom_call.1} parent=27 // pred_check_branch
          %227 = sbr.rel (%p225) target = $region44
        $region43: #{tpu_custom_call.1} parent=27 // pred_region
          %v228 = vld [vmem:[#allocation2] sm:$0xff]
          %v229 = vadd.f32 %v228, 0.0
          %230 = vst [vmem:[%s213] sm:$0xff] %v229
        $region44: #{tpu_custom_call.1} parent=27 // pred_fallthru
          _
        %s231 = sand.u32 %s98, 1
        %s232 = scalar_lea.sflag [#allocation5], %s231
        %s233 = sand.u32 %s98, 1
        %s234 = smul.addr %s233, 8
        %s235 = scalar_lea.vmem [#allocation8], %s234
        // Predicated region
        $region45: #{tpu_custom_call.1} parent=27 // pred_check
          %p236 = pneg %p108
        $region46: #{tpu_custom_call.1} parent=27 // pred_check_branch
          %238 = sbr.rel (%p236) target = $region48
        $region47: #{tpu_custom_call.1} parent=27 // pred_region
          %s240 = ssub.s32 128, 128
          %241 = vsyncadd %s232, %s240
          %s242 = smul.addr %s26, 128
          %s243 = scalar_lea.hbm %s2, %s242
          %s245 = sshll.u32 %s235, 4
          %s246 = int_to_ptr.vmem [resolvable:$true] %s245
          %248 = dma.vmem_to_hbm [thread:$0]  %s246, 128, %s243, %s232
        $region48: #{tpu_custom_call.1} parent=27 // pred_fallthru
          _
      $region28: #{tpu_custom_call.1} parent=5 // pred_fallthru
        _
      %p249 = scmp.le.s32.totalorder 2, %s17
      // Predicated region
      $region49: #{tpu_custom_call.1} parent=5 // pred_check
        %p250 = pneg %p249
      $region50: #{tpu_custom_call.1} parent=5 // pred_check_branch
        %252 = sbr.rel (%p250) target = $region52
      $region51: #{tpu_custom_call.1} parent=5 // pred_region
        %s253 = ssub.s32 %s17, 2
        // Predicated region
        $region53: #{tpu_custom_call.1} parent=51 // pred_check
          %p254 = pneg %p114
        $region54: #{tpu_custom_call.1} parent=51 // pred_check_branch
          %256 = sbr.rel (%p254) target = $region56
        $region55: #{tpu_custom_call.1} parent=51 // pred_region
          %s257 = sand.u32 %s99, 1
          %s258 = scalar_lea.sflag [#allocation5], %s257
          %s259 = sand.u32 %s99, 1
          %s260 = smul.addr %s259, 8
          %s261 = scalar_lea.vmem [#allocation8], %s260
          %262 = dma.done %s258, 128
        $region56: #{tpu_custom_call.1} parent=51 // pred_fallthru
          _
      $region52: #{tpu_custom_call.1} parent=5 // pred_fallthru
        _
    $region6: #{tpu_custom_call.1} parent=1 // loop_footer
      %s21 = sadd.s32 1, %s17
    $region7: #{tpu_custom_call.1} parent=1 // loop_footer_branch
      %16 = sbr.rel target = $region3
    $region8: #{tpu_custom_call.1} parent=1 // loop_exit
      _
    %263 = vsyncpa [#allocation4], 1
    %s264 = scalar_lea.sflag [#allocation4], 1
    %265 = vsyncpa %s264, 1
    %266 = vsyncpa [#allocation7], 1
    %s267 = scalar_lea.sflag [#allocation7], 1
    %268 = vsyncpa %s267, 1
    %269 = vsyncpa [#allocation5], 1
    %s270 = scalar_lea.sflag [#allocation5], 1
    %271 = vsyncpa %s270, 1

</llo_original>
